<compile_context>
chip_gen: v7x
topology: tpu7x:2x2x1
jax: 0.10.0
libtpu: 0.0.40
codegen_flags: <defaults>
</compile_context>

<pallas_src>
import jax
import jax.numpy as jnp
from jax import lax
from jax.experimental import pallas as pl
from jax.experimental.pallas import tpu as pltpu

# ----------------------------- configuration ------------------------------
BS = 8                       # batch size for the demo
TB = 8                       # batch rows per grid step
E = 32                       # embed_dim
USER_DIM = 50
ITEM_DIM = 40
USER_FIELD_DIMS = (6, 9)     # 2 user feature fields
N_FIELDS = 2 + len(USER_FIELD_DIMS) + 3   # user, item, 2 feats, year, genre, name
D = N_FIELDS * E             # embed_output_dim = 224
DP = 256                     # D zero-padded / permuted to a lane multiple
H1, H2 = 64, 64              # mlp_dims
NAME_DIM = 384

# gather-table row layout (multi-hot index space)
ROW_USER = 0
ROW_F0 = USER_DIM                             # 50
ROW_F1 = ROW_F0 + USER_FIELD_DIMS[0]          # 56
ROW_ITEM = ROW_F1 + USER_FIELD_DIMS[1]        # 65
TOT = 128                                     # gather-table rows (65+40=105, padded)

# permuted lane layout: slot s -> lanes [32s, 32s+32)
#   slot 0: user   slot 1: feat0   slot 2: feat1   slot 3: pad (+ lin rider)
#   slot 4: item   slot 5: year    slot 6: genre   slot 7: name
FIELD_SLOT = {0: 0, 1: 4, 2: 1, 3: 2, 4: 5, 5: 6, 6: 7}   # old field -> new slot
LIN_LANE = 3 * E                                           # 96 (FeaturesLinear rider)


# ------------------------------ fused kernel -------------------------------
def _smoothstart_fused_kernel(
    x_ref,       # (TB, 2)   int32  [user_id, item_id]
    feats_ref,   # (TB, 2)   int32  user features
    tab_ref,     # (TOT, DP) f32    multi-hot gather table (embeds + lin rider)
    mlp_w_ref,   # (DP+H1, H1) bf16 [W1 permuted/padded ; W2]
    cn_w_ref,    # (2*DP, DP)  bf16 [Wc1 ; Wc2] permuted rows+cols, zero pad
    misc_ref,    # (8, DP)  f32  rows: b1, b2, bc1, bc2, mlp_w3 row, cn head row, scalar
    o_ref,       # (TB, 1) f32
):
    f32, bf16 = jnp.float32, jnp.bfloat16
    tb = x_ref.shape[0]

    # ---- multi-hot gather of every field with a single matmul ---------------
    x = x_ref[...]
    feats = feats_ref[...]
    u = x[:, 0:1]                       # user rows   [0, 50)
    it = x[:, 1:2] + ROW_ITEM           # item rows   [65, 105)
    f0 = feats[:, 0:1] + ROW_F0         # feat0 rows  [50, 56)
    f1 = feats[:, 1:2] + ROW_F1         # feat1 rows  [56, 65)

    riota = lax.broadcasted_iota(jnp.int32, (tb, TOT), 1)
    hot = ((riota == u) | (riota == it) | (riota == f0) | (riota == f1)).astype(f32)

    # exact gather: every output lane receives at most one nonzero product,
    # except pad lane 96 which sums lin_user + lin_item (the FeaturesLinear term).
    X0 = jnp.dot(hot, tab_ref[...], preferred_element_type=f32)          # (tb, DP)
    X0b = X0.astype(bf16)

    # ---- MLP branch: (Linear -> BN(eval identity) -> ReLU) x2 ---------------
    # TODO(synk): BatchNorm1d = eval-mode identity; dropout=0 is a no-op.
    h = jnp.dot(X0b, mlp_w_ref[0:DP, :],
                preferred_element_type=f32) + misc_ref[0:1, 0:H1]
    h = jnp.maximum(h, 0.0)
    h = jnp.dot(h.astype(bf16), mlp_w_ref[DP:DP + H1, :],
                preferred_element_type=f32) + misc_ref[1:2, 0:H2]
    h = jnp.maximum(h, 0.0)

    # ---- CrossNetV2 (2 layers): X_{i+1} = X_i + X_0 * (X_i @ W_i + b_i) -----
    # pad rows/cols of Wc and pad lanes of b are zero, so lanes 97..127 stay 0
    # and lane 96 (lin rider) propagates unchanged.
    X1 = X0 + X0 * (jnp.dot(X0b, cn_w_ref[0:DP, :],
                            preferred_element_type=f32) + misc_ref[2:3, :])
    X2 = X1 + X0 * (jnp.dot(X1.astype(bf16), cn_w_ref[DP:2 * DP, :],
                            preferred_element_type=f32) + misc_ref[3:4, :])

    # ---- output heads on VPU + XLU lane-reduce (no N=1 MXU matmuls) ---------
    head_mlp = jnp.sum(h * misc_ref[4:5, 0:H2], axis=-1, keepdims=True)
    # cn head row has 1.0 at lane 96 -> also adds the FeaturesLinear sum.
    head_cn = jnp.sum(X2 * misc_ref[5:6, :], axis=-1, keepdims=True)
    o_ref[...] = head_mlp + head_cn + misc_ref[6:7, 0:1]


# ------------------------------ parameter init -----------------------------
def init_params(key):
    ks = jax.random.split(key, 16)
    n = lambda k, shape: (0.02 * jax.random.normal(k, shape)).astype(jnp.float32)
    return {
        # embeddings (all N(0, 0.02) from _init_weights)
        "user_emb": n(ks[0], (USER_DIM, E)),
        "item_emb": n(ks[1], (ITEM_DIM, E)),
        "feat_emb": n(ks[2], (sum(USER_FIELD_DIMS), E)),
        "year_emb": n(ks[3], (26, E)),
        "genre_emb": n(ks[4], (18 + 18, E)),
        # FeaturesLinear
        "lin_emb": n(ks[5], (USER_DIM + ITEM_DIM, 1)),
        "lin_bias": jnp.zeros((1,), jnp.float32),
        # name_fc: Linear(384 -> E)
        "name_w": n(ks[6], (NAME_DIM, E)),
        "name_b": jnp.zeros((1, E), jnp.float32),
        # MLP: D -> 64 -> 64 -> 1
        "mlp_w1": n(ks[7], (D, H1)), "mlp_b1": jnp.zeros((1, H1), jnp.float32),
        "mlp_w2": n(ks[8], (H1, H2)), "mlp_b2": jnp.zeros((1, H2), jnp.float32),
        "mlp_w3": n(ks[9], (H2, 1)), "mlp_b3": jnp.zeros((1, 1), jnp.float32),
        # CrossNetV2 (2 layers) + cn_out
        "cn_w1": n(ks[10], (D, D)), "cn_b1": jnp.zeros((1, D), jnp.float32),
        "cn_w2": n(ks[11], (D, D)), "cn_b2": jnp.zeros((1, D), jnp.float32),
        "cn_out_w": n(ks[12], (D, 1)), "cn_out_b": jnp.zeros((1, 1), jnp.float32),
        # synthetic "dataset" side tables
        "movie_year": jax.random.randint(ks[13], (ITEM_DIM,), 0, 26, jnp.int32),
        "movie_genres": jax.random.randint(ks[14], (ITEM_DIM, 2), 0, 18, jnp.int32),
        "movie_name": jax.random.normal(ks[15], (ITEM_DIM, NAME_DIM), jnp.float32),
    }


def pack_params(p):
    """One-time host-side packing: precompute item features + name_fc, build the
    multi-hot gather table, permute weights to the new lane layout, cast to bf16."""
    f32, bf16 = jnp.float32, jnp.bfloat16

    def permute_rows(w):                      # (D, K) -> (DP, K), pad rows zero
        out = jnp.zeros((DP,) + w.shape[1:], w.dtype)
        for f, s in FIELD_SLOT.items():
            out = out.at[s * E:(s + 1) * E].set(w[f * E:(f + 1) * E])
        return out

    def permute_cols(w):                      # (R, D) -> (R, DP), pad cols zero
        out = jnp.zeros(w.shape[:1] + (DP,), w.dtype)
        for f, s in FIELD_SLOT.items():
            out = out.at[:, s * E:(s + 1) * E].set(w[:, f * E:(f + 1) * E])
        return out

    def permute_lanes(v):                     # (D,) -> (DP,)
        out = jnp.zeros((DP,), v.dtype)
        for f, s in FIELD_SLOT.items():
            out = out.at[s * E:(s + 1) * E].set(v[f * E:(f + 1) * E])
        return out

    # ---- per-item 128-lane slab: [item_emb | year | genre mean | name_fc] ----
    year_tab = p["year_emb"][p["movie_year"]]                           # (ITEM_DIM, E)
    genre_tab = 0.5 * (p["genre_emb"][p["movie_genres"][:, 0]]
                       + p["genre_emb"][18 + p["movie_genres"][:, 1]])  # (ITEM_DIM, E)
    name_tab = p["movie_name"] @ p["name_w"] + p["name_b"]              # (ITEM_DIM, E)
    item_slab = jnp.concatenate([p["item_emb"], year_tab, genre_tab, name_tab],
                                axis=1)                                 # (ITEM_DIM, 4E)

    # ---- multi-hot gather table (TOT, DP) f32 --------------------------------
    tab = jnp.zeros((TOT, DP), f32)
    tab = tab.at[ROW_USER:ROW_USER + USER_DIM, 0 * E:1 * E].set(p["user_emb"])
    tab = tab.at[ROW_F0:ROW_F0 + USER_FIELD_DIMS[0], 1 * E:2 * E].set(
        p["feat_emb"][:USER_FIELD_DIMS[0]])
    tab = tab.at[ROW_F1:ROW_F1 + USER_FIELD_DIMS[1], 2 * E:3 * E].set(
        p["feat_emb"][USER_FIELD_DIMS[0]:])
    tab = tab.at[ROW_ITEM:ROW_ITEM + ITEM_DIM, 4 * E:8 * E].set(item_slab)
    # FeaturesLinear rider on pad lane 96 (lin_u + lin_i summed by the multi-hot)
    tab = tab.at[ROW_USER:ROW_USER + USER_DIM, LIN_LANE].set(p["lin_emb"][:USER_DIM, 0])
    tab = tab.at[ROW_ITEM:ROW_ITEM + ITEM_DIM, LIN_LANE].set(p["lin_emb"][USER_DIM:, 0])

    # ---- weight slabs (bf16, permuted to the new lane layout) ----------------
    mlp_w = jnp.concatenate([permute_rows(p["mlp_w1"]), p["mlp_w2"]],
                            axis=0).astype(bf16)                        # (DP+H1, H1)
    cn_w = jnp.concatenate([permute_cols(permute_rows(p["cn_w1"])),
                            permute_cols(permute_rows(p["cn_w2"]))],
                           axis=0).astype(bf16)                         # (2DP, DP)

    # ---- misc slab (biases + head row vectors, f32) ---------------------------
    misc = jnp.zeros((8, DP), f32)
    misc = misc.at[0, :H1].set(p["mlp_b1"][0])
    misc = misc.at[1, :H2].set(p["mlp_b2"][0])
    misc = misc.at[2, :].set(permute_lanes(p["cn_b1"][0]))
    misc = misc.at[3, :].set(permute_lanes(p["cn_b2"][0]))
    misc = misc.at[4, :H2].set(p["mlp_w3"][:, 0])
    cn_head = permute_lanes(p["cn_out_w"][:, 0]).at[LIN_LANE].set(1.0)
    misc = misc.at[5, :].set(cn_head)
    misc = misc.at[6, 0].set(p["mlp_b3"][0, 0] + p["cn_out_b"][0, 0] + p["lin_bias"][0])

    return {"gather_tab": tab, "mlp_w": mlp_w, "cn_w": cn_w, "misc": misc}


# ------------------------------ forward wrapper -----------------------------
def _forward(packed, x, feats):
    """x: (bs, 2) int32 [user_id, item_id]; feats: (bs, 2) int32 user features.
    bs must be a multiple of TB (=8)."""
    bs = x.shape[0]
    n_tiles = bs // TB
    const = lambda arr: pl.BlockSpec(arr.shape, lambda i: (0, 0))
    grid_spec = pltpu.PrefetchScalarGridSpec(
        num_scalar_prefetch=0,
        grid=(n_tiles,),
        in_specs=[
            pl.BlockSpec((TB, 2), lambda i: (i, 0)),     # x
            pl.BlockSpec((TB, 2), lambda i: (i, 0)),     # feats
            const(packed["gather_tab"]),
            const(packed["mlp_w"]),
            const(packed["cn_w"]),
            const(packed["misc"]),
        ],
        out_specs=pl.BlockSpec((TB, 1), lambda i: (i, 0)),
    )
    out = pl.pallas_call(
        _smoothstart_fused_kernel,
        out_shape=jax.ShapeDtypeStruct((bs, 1), jnp.float32),
        grid_spec=grid_spec,
        compiler_params=pltpu.CompilerParams(dimension_semantics=("parallel",)),
    )(
        x.astype(jnp.int32), feats.astype(jnp.int32),
        packed["gather_tab"], packed["mlp_w"], packed["cn_w"], packed["misc"],
    )
    return out[:, 0]                                     # .squeeze(1)


smoothstart_forward = jax.jit(_forward)


# --------------------------- pure-JAX reference ------------------------------
def _reference(p, x, feats):
    u, it = x[:, 0], x[:, 1]
    user_e = p["user_emb"][u]
    item_e = p["item_emb"][it]
    f0e = p["feat_emb"][feats[:, 0]]
    f1e = p["feat_emb"][USER_FIELD_DIMS[0] + feats[:, 1]]
    year_e = p["year_emb"][p["movie_year"][it]]
    g = p["movie_genres"][it]
    genre_e = 0.5 * (p["genre_emb"][g[:, 0]] + p["genre_emb"][18 + g[:, 1]])
    name_e = p["movie_name"][it] @ p["name_w"] + p["name_b"]
    X0 = jnp.concatenate([user_e, item_e, f0e, f1e, year_e, genre_e, name_e], axis=1)
    lin = p["lin_emb"][u, 0] + p["lin_emb"][USER_DIM + it, 0] + p["lin_bias"][0]
    h = jnp.maximum(X0 @ p["mlp_w1"] + p["mlp_b1"], 0.0)     # BN eval identity
    h = jnp.maximum(h @ p["mlp_w2"] + p["mlp_b2"], 0.0)
    mlp_out = (h @ p["mlp_w3"] + p["mlp_b3"])[:, 0]
    X1 = X0 + X0 * (X0 @ p["cn_w1"] + p["cn_b1"])
    X2 = X1 + X0 * (X1 @ p["cn_w2"] + p["cn_b2"])
    cn = (X2 @ p["cn_out_w"] + p["cn_out_b"])[:, 0]
    return lin + mlp_out + cn


# ---------------------------------- main ------------------------------------
if __name__ == "__main__":
    key = jax.random.PRNGKey(0)
    kp, kx, kf = jax.random.split(key, 3)
    params = init_params(kp)
    packed = pack_params(params)

    uid = jax.random.randint(kx, (BS, 1), 0, USER_DIM, jnp.int32)
    iid = jax.random.randint(jax.random.fold_in(kx, 1), (BS, 1), 0, ITEM_DIM, jnp.int32)
    x = jnp.concatenate([uid, iid], axis=1)                            # (bs, 2)
    f0 = jax.random.randint(kf, (BS, 1), 0, USER_FIELD_DIMS[0], jnp.int32)
    f1 = jax.random.randint(jax.random.fold_in(kf, 1), (BS, 1), 0,
                            USER_FIELD_DIMS[1], jnp.int32)
    feats = jnp.concatenate([f0, f1], axis=1)                          # (bs, 2)

    out = smoothstart_forward(packed, x, feats)
    out = jax.block_until_ready(out)
    assert out.shape == (BS,) and out.dtype == jnp.float32
    assert bool(jnp.all(jnp.isfinite(out)))

    # correctness vs. pure-JAX f32 reference (bf16-at-dot-site tolerance)
    ref = _reference(params, x, feats)
    max_err = float(jnp.max(jnp.abs(out - ref)))
    assert max_err < 2e-2, f"mismatch vs reference: {max_err}"

    print("KERNEL_OK")
</pallas_src>

<mosaic_0001>
module attributes {stable_mosaic.version = 11 : i64} {
  func.func @_smoothstart_fused_kernel(%arg0: i32, %arg1: memref<8x2xi32, #tpu.memory_space<vmem>>, %arg2: memref<8x2xi32, #tpu.memory_space<vmem>>, %arg3: memref<128x256xf32, #tpu.memory_space<vmem>>, %arg4: memref<320x64xbf16, #tpu.memory_space<vmem>>, %arg5: memref<512x256xbf16, #tpu.memory_space<vmem>>, %arg6: memref<8x256xf32, #tpu.memory_space<vmem>>, %arg7: memref<8x1xf32, #tpu.memory_space<vmem>>) attributes {dimension_semantics = [#tpu.dimension_semantics<parallel>], iteration_bounds = array<i64: 1>, scalar_prefetch = 0 : i64, scratch_operands = 0 : i64, tpu.core_type = #tpu.core_type<tc>, window_params = [{transform_indices = @transform_0, window_bounds = array<i64: 8, 2>}, {transform_indices = @transform_1, window_bounds = array<i64: 8, 2>}, {pipeline_mode = #tpu.pipeline_mode<synchronous>, transform_indices = @transform_2, window_bounds = array<i64: 128, 256>}, {pipeline_mode = #tpu.pipeline_mode<synchronous>, transform_indices = @transform_3, window_bounds = array<i64: 320, 64>}, {pipeline_mode = #tpu.pipeline_mode<synchronous>, transform_indices = @transform_4, window_bounds = array<i64: 512, 256>}, {pipeline_mode = #tpu.pipeline_mode<synchronous>, transform_indices = @transform_5, window_bounds = array<i64: 8, 256>}, {transform_indices = @transform_6, window_bounds = array<i64: 8, 1>}]} {
    %c0 = arith.constant 0 : index
    %c0_0 = arith.constant 0 : index
    %0 = vector.load %arg1[%c0, %c0_0] : memref<8x2xi32, #tpu.memory_space<vmem>>, vector<8x2xi32>
    %c0_1 = arith.constant 0 : index
    %c0_2 = arith.constant 0 : index
    %1 = vector.load %arg2[%c0_1, %c0_2] : memref<8x2xi32, #tpu.memory_space<vmem>>, vector<8x2xi32>
    %2 = vector.extract_strided_slice %0 {offsets = [0, 0], sizes = [8, 1], strides = [1, 1]} : vector<8x2xi32> to vector<8x1xi32>
    %3 = vector.extract_strided_slice %0 {offsets = [0, 1], sizes = [8, 1], strides = [1, 1]} : vector<8x2xi32> to vector<8x1xi32>
    %c65_i32 = arith.constant 65 : i32
    %4 = vector.broadcast %c65_i32 : i32 to vector<8x1xi32>
    %5 = arith.addi %3, %4 : vector<8x1xi32>
    %6 = vector.extract_strided_slice %1 {offsets = [0, 0], sizes = [8, 1], strides = [1, 1]} : vector<8x2xi32> to vector<8x1xi32>
    %c50_i32 = arith.constant 50 : i32
    %7 = vector.broadcast %c50_i32 : i32 to vector<8x1xi32>
    %8 = arith.addi %6, %7 : vector<8x1xi32>
    %9 = vector.extract_strided_slice %1 {offsets = [0, 1], sizes = [8, 1], strides = [1, 1]} : vector<8x2xi32> to vector<8x1xi32>
    %c56_i32 = arith.constant 56 : i32
    %10 = vector.broadcast %c56_i32 : i32 to vector<8x1xi32>
    %11 = arith.addi %9, %10 : vector<8x1xi32>
    %12 = tpu.iota {dimensions = array<i32: 1>} : vector<8x128xi32>
    %13 = vector.broadcast %2 : vector<8x1xi32> to vector<8x128xi32>
    %14 = arith.cmpi eq, %12, %13 : vector<8x128xi32>
    %15 = vector.broadcast %5 : vector<8x1xi32> to vector<8x128xi32>
    %16 = arith.cmpi eq, %12, %15 : vector<8x128xi32>
    %17 = arith.ori %14, %16 : vector<8x128xi1>
    %18 = vector.broadcast %8 : vector<8x1xi32> to vector<8x128xi32>
    %19 = arith.cmpi eq, %12, %18 : vector<8x128xi32>
    %20 = arith.ori %17, %19 : vector<8x128xi1>
    %21 = vector.broadcast %11 : vector<8x1xi32> to vector<8x128xi32>
    %22 = arith.cmpi eq, %12, %21 : vector<8x128xi32>
    %23 = arith.ori %20, %22 : vector<8x128xi1>
    %24 = arith.extui %23 : vector<8x128xi1> to vector<8x128xi32>
    %25 = arith.sitofp %24 : vector<8x128xi32> to vector<8x128xf32>
    %c0_3 = arith.constant 0 : index
    %c0_4 = arith.constant 0 : index
    %26 = vector.load %arg3[%c0_3, %c0_4] : memref<128x256xf32, #tpu.memory_space<vmem>>, vector<128x256xf32>
    %cst = arith.constant dense<0.000000e+00> : vector<8x256xf32>
    %27 = tpu.matmul %25, %26, %cst {dimension_numbers = #tpu.dot_dimension_numbers<[1], [0], [0], [1], [0, 0, 1, 1], [], []>} : vector<8x128xf32>, vector<128x256xf32>, vector<8x256xf32> -> vector<8x256xf32>
    %28 = arith.truncf %27 : vector<8x256xf32> to vector<8x256xbf16>
    %c0_5 = arith.constant 0 : index
    %c0_6 = arith.constant 0 : index
    %29 = vector.load %arg4[%c0_5, %c0_6] : memref<320x64xbf16, #tpu.memory_space<vmem>>, vector<256x64xbf16>
    %cst_7 = arith.constant dense<0.000000e+00> : vector<8x64xf32>
    %30 = tpu.matmul %28, %29, %cst_7 {dimension_numbers = #tpu.dot_dimension_numbers<[1], [0], [0], [1], [0, 0, 1, 1], [], []>} : vector<8x256xbf16>, vector<256x64xbf16>, vector<8x64xf32> -> vector<8x64xf32>
    %c0_8 = arith.constant 0 : index
    %c0_9 = arith.constant 0 : index
    %31 = vector.load %arg6[%c0_8, %c0_9] : memref<8x256xf32, #tpu.memory_space<vmem>>, vector<1x64xf32>
    %32 = vector.broadcast %31 : vector<1x64xf32> to vector<8x64xf32>
    %33 = arith.addf %30, %32 : vector<8x64xf32>
    %cst_10 = arith.constant 0.000000e+00 : f32
    %34 = vector.broadcast %cst_10 : f32 to vector<8x64xf32>
    %35 = arith.maximumf %33, %34 : vector<8x64xf32>
    %36 = arith.truncf %35 : vector<8x64xf32> to vector<8x64xbf16>
    %c256 = arith.constant 256 : index
    %c0_11 = arith.constant 0 : index
    %37 = vector.load %arg4[%c256, %c0_11] : memref<320x64xbf16, #tpu.memory_space<vmem>>, vector<64x64xbf16>
    %cst_12 = arith.constant dense<0.000000e+00> : vector<8x64xf32>
    %38 = tpu.matmul %36, %37, %cst_12 {dimension_numbers = #tpu.dot_dimension_numbers<[1], [0], [0], [1], [0, 0, 1, 1], [], []>} : vector<8x64xbf16>, vector<64x64xbf16>, vector<8x64xf32> -> vector<8x64xf32>
    %c1 = arith.constant 1 : index
    %c0_13 = arith.constant 0 : index
    %39 = vector.load %arg6[%c1, %c0_13] : memref<8x256xf32, #tpu.memory_space<vmem>>, vector<1x64xf32>
    %40 = vector.broadcast %39 : vector<1x64xf32> to vector<8x64xf32>
    %41 = arith.addf %38, %40 : vector<8x64xf32>
    %cst_14 = arith.constant 0.000000e+00 : f32
    %42 = vector.broadcast %cst_14 : f32 to vector<8x64xf32>
    %43 = arith.maximumf %41, %42 : vector<8x64xf32>
    %c0_15 = arith.constant 0 : index
    %c0_16 = arith.constant 0 : index
    %44 = vector.load %arg5[%c0_15, %c0_16] : memref<512x256xbf16, #tpu.memory_space<vmem>>, vector<256x256xbf16>
    %cst_17 = arith.constant dense<0.000000e+00> : vector<8x256xf32>
    %45 = tpu.matmul %28, %44, %cst_17 {dimension_numbers = #tpu.dot_dimension_numbers<[1], [0], [0], [1], [0, 0, 1, 1], [], []>} : vector<8x256xbf16>, vector<256x256xbf16>, vector<8x256xf32> -> vector<8x256xf32>
    %c2 = arith.constant 2 : index
    %c0_18 = arith.constant 0 : index
    %46 = vector.load %arg6[%c2, %c0_18] : memref<8x256xf32, #tpu.memory_space<vmem>>, vector<1x256xf32>
    %47 = vector.broadcast %46 : vector<1x256xf32> to vector<8x256xf32>
    %48 = arith.addf %45, %47 : vector<8x256xf32>
    %49 = arith.mulf %27, %48 : vector<8x256xf32>
    %50 = arith.addf %27, %49 : vector<8x256xf32>
    %51 = arith.truncf %50 : vector<8x256xf32> to vector<8x256xbf16>
    %c256_19 = arith.constant 256 : index
    %c0_20 = arith.constant 0 : index
    %52 = vector.load %arg5[%c256_19, %c0_20] : memref<512x256xbf16, #tpu.memory_space<vmem>>, vector<256x256xbf16>
    %cst_21 = arith.constant dense<0.000000e+00> : vector<8x256xf32>
    %53 = tpu.matmul %51, %52, %cst_21 {dimension_numbers = #tpu.dot_dimension_numbers<[1], [0], [0], [1], [0, 0, 1, 1], [], []>} : vector<8x256xbf16>, vector<256x256xbf16>, vector<8x256xf32> -> vector<8x256xf32>
    %c3 = arith.constant 3 : index
    %c0_22 = arith.constant 0 : index
    %54 = vector.load %arg6[%c3, %c0_22] : memref<8x256xf32, #tpu.memory_space<vmem>>, vector<1x256xf32>
    %55 = vector.broadcast %54 : vector<1x256xf32> to vector<8x256xf32>
    %56 = arith.addf %53, %55 : vector<8x256xf32>
    %57 = arith.mulf %27, %56 : vector<8x256xf32>
    %58 = arith.addf %50, %57 : vector<8x256xf32>
    %c4 = arith.constant 4 : index
    %c0_23 = arith.constant 0 : index
    %59 = vector.load %arg6[%c4, %c0_23] : memref<8x256xf32, #tpu.memory_space<vmem>>, vector<1x64xf32>
    %60 = vector.broadcast %59 : vector<1x64xf32> to vector<8x64xf32>
    %61 = arith.mulf %43, %60 : vector<8x64xf32>
    %cst_24 = arith.constant dense<0.000000e+00> : vector<8xf32>
    %62 = vector.multi_reduction <add>, %61, %cst_24 [1] : vector<8x64xf32> to vector<8xf32>
    %63 = vector.shape_cast %62 : vector<8xf32> to vector<8x1xf32>
    %c5 = arith.constant 5 : index
    %c0_25 = arith.constant 0 : index
    %64 = vector.load %arg6[%c5, %c0_25] : memref<8x256xf32, #tpu.memory_space<vmem>>, vector<1x256xf32>
    %65 = vector.broadcast %64 : vector<1x256xf32> to vector<8x256xf32>
    %66 = arith.mulf %58, %65 : vector<8x256xf32>
    %cst_26 = arith.constant dense<0.000000e+00> : vector<8xf32>
    %67 = vector.multi_reduction <add>, %66, %cst_26 [1] : vector<8x256xf32> to vector<8xf32>
    %68 = vector.shape_cast %67 : vector<8xf32> to vector<8x1xf32>
    %69 = arith.addf %63, %68 : vector<8x1xf32>
    %c6 = arith.constant 6 : index
    %c0_27 = arith.constant 0 : index
    %70 = vector.load %arg6[%c6, %c0_27] : memref<8x256xf32, #tpu.memory_space<vmem>>, vector<1x1xf32>
    %71 = vector.broadcast %70 : vector<1x1xf32> to vector<8x1xf32>
    %72 = arith.addf %69, %71 : vector<8x1xf32>
    %c0_28 = arith.constant 0 : index
    %c0_29 = arith.constant 0 : index
    %73 = vector.load %arg7[%c0_28, %c0_29] : memref<8x1xf32, #tpu.memory_space<vmem>>, vector<8x1xf32>
    tpu.vector_store %arg7[%c0_28, %c0_29], %72 {strides = array<i32>} : memref<8x1xf32, #tpu.memory_space<vmem>>, vector<8x1xf32>,
    return
  }
  func.func @transform_0(%arg0: i32) -> (i32, i32) {
    %c0_i32 = arith.constant 0 : i32
    %c0_i32_0 = arith.constant 0 : i32
    return %arg0, %c0_i32 : i32, i32
  }
  func.func @transform_1(%arg0: i32) -> (i32, i32) {
    %c0_i32 = arith.constant 0 : i32
    %c0_i32_0 = arith.constant 0 : i32
    return %arg0, %c0_i32 : i32, i32
  }
  func.func @transform_2(%arg0: i32) -> (i32, i32) {
    %c0_i32 = arith.constant 0 : i32
    %c0_i32_0 = arith.constant 0 : i32
    %c0_i32_1 = arith.constant 0 : i32
    return %c0_i32, %c0_i32_0 : i32, i32
  }
  func.func @transform_3(%arg0: i32) -> (i32, i32) {
    %c0_i32 = arith.constant 0 : i32
    %c0_i32_0 = arith.constant 0 : i32
    %c0_i32_1 = arith.constant 0 : i32
    return %c0_i32, %c0_i32_0 : i32, i32
  }
  func.func @transform_4(%arg0: i32) -> (i32, i32) {
    %c0_i32 = arith.constant 0 : i32
    %c0_i32_0 = arith.constant 0 : i32
    %c0_i32_1 = arith.constant 0 : i32
    return %c0_i32, %c0_i32_0 : i32, i32
  }
  func.func @transform_5(%arg0: i32) -> (i32, i32) {
    %c0_i32 = arith.constant 0 : i32
    %c0_i32_0 = arith.constant 0 : i32
    %c0_i32_1 = arith.constant 0 : i32
    return %c0_i32, %c0_i32_0 : i32, i32
  }
  func.func @transform_6(%arg0: i32) -> (i32, i32) {
    %c0_i32 = arith.constant 0 : i32
    %c0_i32_0 = arith.constant 0 : i32
    return %arg0, %c0_i32 : i32, i32
  }
}

</mosaic_0001>

<llo_original>
// kernel: _forward.1
$region0: #{_forward.1}
  #allocation0 [shape = 'u32[]', space=smem, size = 0x4, offset = 0x4, fixed_abs, tag = 'smem constant byte address 0x4 - core index']
  #allocation1 [shape = 'u32[144,128]{1,0:T(1,128)}', space=vmem, size = 0x12000, scoped, tag = 'internal scratch']
  %s0 = inlined_call_operand.vmem [shape: s32[8,2], index: 0, kind: input, shape index: {}]
  %s1 = inlined_call_operand.vmem [shape: s32[8,2], index: 1, kind: input, shape index: {}]
  %s2 = inlined_call_operand.vmem [shape: f32[128,256], index: 2, kind: input, shape index: {}]
  %s3 = inlined_call_operand.vmem [shape: bf16[320,64], index: 3, kind: input, shape index: {}]
  %s4 = inlined_call_operand.hbm [shape: bf16[512,256], index: 4, kind: input, shape index: {}]
  %s5 = inlined_call_operand.vmem [shape: f32[8,256], index: 5, kind: input, shape index: {}]
  %s6 = inlined_call_operand.vmem [shape: f32[8,1], index: 6, kind: output, shape index: {}]
  %s7 = sld [smem:[#allocation0]]
  $region38: #{_forward.1} parent=0
    _
  %s9 = ssub.s32 1, %s7
  %s10 = scalar_select 0, %s9, %s7
  $region1: #{_forward.1} parent=0
    #allocation2 [shape = 'u8[262144]{0}', space=vmem, size = 0x40000, scoped, tag = 'input window, operand 4, single buffered']
    #allocation3 [shape = 's32[1]{0}', space=sflag, size = 0x4, scoped, tag = 'scoped memory for _forward.1']
    %11 = vsyncpa [#allocation3], 0
    // Predicated region
    $region2: #{_forward.1} parent=1 // pred_check
      _
    $region3: #{_forward.1} parent=1 // pred_check_branch
      %13 = sbr.rel (0) target = $region5
    $region4: #{_forward.1} parent=1 // pred_region
      _
    $region5: #{_forward.1} parent=1 // pred_fallthru
      _
    // Predicated region
    $region6: #{_forward.1} parent=1 // pred_check
      _
    $region7: #{_forward.1} parent=1 // pred_check_branch
      %15 = sbr.rel (0) target = $region9
    $region8: #{_forward.1} parent=1 // pred_region
      _
    $region9: #{_forward.1} parent=1 // pred_fallthru
      _
    // Predicated region
    $region10: #{_forward.1} parent=1 // pred_check
      _
    $region11: #{_forward.1} parent=1 // pred_check_branch
      %17 = sbr.rel (0) target = $region13
    $region12: #{_forward.1} parent=1 // pred_region
      _
    $region13: #{_forward.1} parent=1 // pred_fallthru
      _
    // Predicated region
    $region14: #{_forward.1} parent=1 // pred_check
      _
    $region15: #{_forward.1} parent=1 // pred_check_branch
      %19 = sbr.rel (0) target = $region17
    $region16: #{_forward.1} parent=1 // pred_region
      _
    $region17: #{_forward.1} parent=1 // pred_fallthru
      _
    // Predicated region
    $region18: #{_forward.1} parent=1 // pred_check
      _
    $region19: #{_forward.1} parent=1 // pred_check_branch
      %21 = sbr.rel (0) target = $region21
    $region20: #{_forward.1} parent=1 // pred_region
      %s23 = ssub.s32 8192, 8192
      %24 = vsyncadd [#allocation3], %s23
      %s25 = sshll.u32 [#allocation2], 4
      %s26 = int_to_ptr.vmem [resolvable:$true] %s25
      %31 = dma.hbm_to_vmem [thread:$0]  %s4, 8192, %s26, [#allocation3], 128, 128, 8
    $region21: #{_forward.1} parent=1 // pred_fallthru
      _
    // Predicated region
    $region22: #{_forward.1} parent=1 // pred_check
      _
    $region23: #{_forward.1} parent=1 // pred_check_branch
      %33 = sbr.rel (0) target = $region25
    $region24: #{_forward.1} parent=1 // pred_region
      _
    $region25: #{_forward.1} parent=1 // pred_fallthru
      _
    // Predicated region
    $region26: #{_forward.1} parent=1 // pred_check
      _
    $region27: #{_forward.1} parent=1 // pred_check_branch
      %35 = sbr.rel (0) target = $region29
    $region28: #{_forward.1} parent=1 // pred_region
      %36 = dma.done [#allocation3], 8192
    $region29: #{_forward.1} parent=1 // pred_fallthru
      _
    %v38 = vld [vmem:[%s0] sm:$0xff]
    %v39 = vld [vmem:[%s1] sm:$0xff]
    %v40 = vadd.s32 %v38, 65
    %v41 = vadd.s32 %v39, 50
    %v42 = vadd.s32 %v39, 56
    %v43 = vlaneseq
    %v44 = vand.u32 %v43, 127
    %45 = vset.pattern.permute.xlu0 0
    %46 = vperm.xlu0 %45, %v38
    %v47 = vpop.permute.xlu0 %46
    %vm48 = vcmp.eq.s32.totalorder %v44, %v47
    %49 = vset.pattern.permute.xlu0 1
    %50 = vperm.xlu0 %49, %v40
    %v51 = vpop.permute.xlu0 %50
    %vm52 = vcmp.eq.s32.totalorder %v44, %v51
    %vm53 = vmor %vm48, %vm52
    %54 = vset.pattern.permute.xlu0 0
    %55 = vperm.xlu0 %54, %v41
    %v56 = vpop.permute.xlu0 %55
    %vm57 = vcmp.eq.s32.totalorder %v44, %v56
    %vm58 = vmor %vm53, %vm57
    %59 = vset.pattern.permute.xlu0 1
    %60 = vperm.xlu0 %59, %v42
    %v61 = vpop.permute.xlu0 %60
    %vm62 = vcmp.eq.s32.totalorder %v44, %v61
    %vm63 = vmor %vm58, %vm62
    %v64 = vsel %vm63, 1, 0
    %v65 = vcvt.s32.f32 %v64
    %v66 = vld [vmem:[%s2] sm:$0xff]
    %v67 = vld [vmem:[%s2 + $0x8] sm:$0xff]
    %v68 = vld [vmem:[%s2 + $0x10] sm:$0xff]
    %v69 = vld [vmem:[%s2 + $0x18] sm:$0xff]
    %v70 = vld [vmem:[%s2 + $0x20] sm:$0xff]
    %v71 = vld [vmem:[%s2 + $0x28] sm:$0xff]
    %v72 = vld [vmem:[%s2 + $0x30] sm:$0xff]
    %v73 = vld [vmem:[%s2 + $0x38] sm:$0xff]
    %v74 = vld [vmem:[%s2 + $0x40] sm:$0xff]
    %v75 = vld [vmem:[%s2 + $0x48] sm:$0xff]
    %v76 = vld [vmem:[%s2 + $0x50] sm:$0xff]
    %v77 = vld [vmem:[%s2 + $0x58] sm:$0xff]
    %v78 = vld [vmem:[%s2 + $0x60] sm:$0xff]
    %v79 = vld [vmem:[%s2 + $0x68] sm:$0xff]
    %v80 = vld [vmem:[%s2 + $0x70] sm:$0xff]
    %v81 = vld [vmem:[%s2 + $0x78] sm:$0xff]
    %v82 = vld [vmem:[%s2 + $0x80] sm:$0xff]
    %v83 = vld [vmem:[%s2 + $0x88] sm:$0xff]
    %v84 = vld [vmem:[%s2 + $0x90] sm:$0xff]
    %v85 = vld [vmem:[%s2 + $0x98] sm:$0xff]
    %v86 = vld [vmem:[%s2 + $0xa0] sm:$0xff]
    %v87 = vld [vmem:[%s2 + $0xa8] sm:$0xff]
    %v88 = vld [vmem:[%s2 + $0xb0] sm:$0xff]
    %v89 = vld [vmem:[%s2 + $0xb8] sm:$0xff]
    %v90 = vld [vmem:[%s2 + $0xc0] sm:$0xff]
    %v91 = vld [vmem:[%s2 + $0xc8] sm:$0xff]
    %v92 = vld [vmem:[%s2 + $0xd0] sm:$0xff]
    %v93 = vld [vmem:[%s2 + $0xd8] sm:$0xff]
    %v94 = vld [vmem:[%s2 + $0xe0] sm:$0xff]
    %v95 = vld [vmem:[%s2 + $0xe8] sm:$0xff]
    %v96 = vld [vmem:[%s2 + $0xf0] sm:$0xff]
    %v97 = vld [vmem:[%s2 + $0xf8] sm:$0xff]
    %98 = vmatprep.subr.mxu0 %v67
    %99 = vmatpush1.msra.mxu0 %v66
    %100 = vmatprep.subr.mxu0 %v69
    %101 = vmatpush1.msra.mxu0 %v68
    %102 = vmatprep.subr.mxu0 %v71
    %103 = vmatpush1.msra.mxu0 %v70
    %104 = vmatprep.subr.mxu0 %v73
    %105 = vmatpush1.msra.mxu0 %v72
    %106 = vmatprep.subr.mxu0 %v75
    %107 = vmatpush1.msra.mxu0 %v74
    %108 = vmatprep.subr.mxu0 %v77
    %109 = vmatpush1.msra.mxu0 %v76
    %110 = vmatprep.subr.mxu0 %v79
    %111 = vmatpush1.msra.mxu0 %v78
    %112 = vmatprep.subr.mxu0 %v81
    %113 = vmatpush1.msra.mxu0 %v80
    %114 = vmatprep.subr.mxu0 %v83
    %115 = vmatpush1.msra.mxu0 %v82
    %116 = vmatprep.subr.mxu0 %v85
    %117 = vmatpush1.msra.mxu0 %v84
    %118 = vmatprep.subr.mxu0 %v87
    %119 = vmatpush1.msra.mxu0 %v86
    %120 = vmatprep.subr.mxu0 %v89
    %121 = vmatpush1.msra.mxu0 %v88
    %122 = vmatprep.subr.mxu0 %v91
    %123 = vmatpush1.msra.mxu0 %v90
    %124 = vmatprep.subr.mxu0 %v93
    %125 = vmatpush1.msra.mxu0 %v92
    %126 = vmatprep.subr.mxu0 %v95
    %127 = vmatpush1.msra.mxu0 %v94
    %128 = vmatprep.subr.mxu0 %v97
    %129 = vmatpush1.msra.mxu0 %v96
    %130 = vmatprep.subr.mxu0 0.0
    %131 = vmatpush1.msra.mxu0 0.0
    %132 = vmatprep.subr.mxu0 0.0
    %133 = vmatpush1.msra.mxu0 0.0
    %134 = vmatprep.subr.mxu0 0.0
    %135 = vmatpush1.msra.mxu0 0.0
    %136 = vmatprep.subr.mxu0 0.0
    %137 = vmatpush1.msra.mxu0 0.0
    %138 = vmatprep.subr.mxu0 0.0
    %139 = vmatpush1.msra.mxu0 0.0
    %140 = vmatprep.subr.mxu0 0.0
    %141 = vmatpush1.msra.mxu0 0.0
    %142 = vmatprep.subr.mxu0 0.0
    %143 = vmatpush1.msra.mxu0 0.0
    %144 = vmatprep.subr.mxu0 0.0
    %145 = vmatpush1.msra.mxu0 0.0
    %146 = vmatprep.subr.mxu0 0.0
    %147 = vmatpush1.msra.mxu0 0.0
    %148 = vmatprep.subr.mxu0 0.0
    %149 = vmatpush1.msra.mxu0 0.0
    %150 = vmatprep.subr.mxu0 0.0
    %151 = vmatpush1.msra.mxu0 0.0
    %152 = vmatprep.subr.mxu0 0.0
    %153 = vmatpush1.msra.mxu0 0.0
    %154 = vmatprep.subr.mxu0 0.0
    %155 = vmatpush1.msra.mxu0 0.0
    %156 = vmatprep.subr.mxu0 0.0
    %157 = vmatpush1.msra.mxu0 0.0
    %158 = vmatprep.subr.mxu0 0.0
    %159 = vmatpush1.msra.mxu0 0.0
    %160 = vmatprep.subr.mxu0 0.0
    %161 = vmatpush1.msra.mxu0 0.0
    %162 = vmatprep.mubr.f32.mxu0 0.0
    %163 = vmatmul.mubr.f32.gmra.mrb[0].mxu0 %v65
    %v164 = vpop.f32.mrb[0].mxu0
    %v165 = vadd.f32 0.0, %v164
    %v166 = vpop.f32.mrb[0].mxu0
    %v167 = vadd.f32 0.0, %v166
    %168 = vdwg.mxu0
    %v169 = vpack.c.bf16 %v165, %v165
    %v170 = vpack.c.bf16 %v167, %v167
    %v171 = vld [vmem:[%s3] sm:$0xf]
    %v172 = vld [vmem:[%s3 + $0x4] sm:$0xf]
    %v173 = vld [vmem:[%s3 + $0x8] sm:$0xf]
    %v174 = vld [vmem:[%s3 + $0xc] sm:$0xf]
    %v175 = vld [vmem:[%s3 + $0x10] sm:$0xf]
    %v176 = vld [vmem:[%s3 + $0x14] sm:$0xf]
    %v177 = vld [vmem:[%s3 + $0x18] sm:$0xf]
    %v178 = vld [vmem:[%s3 + $0x1c] sm:$0xf]
    %v179 = vld [vmem:[%s3 + $0x20] sm:$0xf]
    %v180 = vld [vmem:[%s3 + $0x24] sm:$0xf]
    %v181 = vld [vmem:[%s3 + $0x28] sm:$0xf]
    %v182 = vld [vmem:[%s3 + $0x2c] sm:$0xf]
    %v183 = vld [vmem:[%s3 + $0x30] sm:$0xf]
    %v184 = vld [vmem:[%s3 + $0x34] sm:$0xf]
    %v185 = vld [vmem:[%s3 + $0x38] sm:$0xf]
    %v186 = vld [vmem:[%s3 + $0x3c] sm:$0xf]
    %v187 = vld [vmem:[%s3 + $0x40] sm:$0xf]
    %v188 = vld [vmem:[%s3 + $0x44] sm:$0xf]
    %v189 = vld [vmem:[%s3 + $0x48] sm:$0xf]
    %v190 = vld [vmem:[%s3 + $0x4c] sm:$0xf]
    %v191 = vld [vmem:[%s3 + $0x50] sm:$0xf]
    %v192 = vld [vmem:[%s3 + $0x54] sm:$0xf]
    %v193 = vld [vmem:[%s3 + $0x58] sm:$0xf]
    %v194 = vld [vmem:[%s3 + $0x5c] sm:$0xf]
    %v195 = vld [vmem:[%s3 + $0x60] sm:$0xf]
    %v196 = vld [vmem:[%s3 + $0x64] sm:$0xf]
    %v197 = vld [vmem:[%s3 + $0x68] sm:$0xf]
    %v198 = vld [vmem:[%s3 + $0x6c] sm:$0xf]
    %v199 = vld [vmem:[%s3 + $0x70] sm:$0xf]
    %v200 = vld [vmem:[%s3 + $0x74] sm:$0xf]
    %v201 = vld [vmem:[%s3 + $0x78] sm:$0xf]
    %v202 = vld [vmem:[%s3 + $0x7c] sm:$0xf]
    %v203 = vld [vmem:[%s5] ss:$0 sm:$0xff]
    %v236 = vunpack.c.l.b16 %v171
    %v237 = vunpack.c.l.b16 %v172
    %v238 = vunpack.c.l.b16 %v173
    %v239 = vunpack.c.l.b16 %v174
    %v240 = vunpack.c.l.b16 %v175
    %v241 = vunpack.c.l.b16 %v176
    %v242 = vunpack.c.l.b16 %v177
    %v243 = vunpack.c.l.b16 %v178
    %v244 = vunpack.c.l.b16 %v179
    %v245 = vunpack.c.l.b16 %v180
    %v246 = vunpack.c.l.b16 %v181
    %v247 = vunpack.c.l.b16 %v182
    %v248 = vunpack.c.l.b16 %v183
    %v249 = vunpack.c.l.b16 %v184
    %v250 = vunpack.c.l.b16 %v185
    %v251 = vunpack.c.l.b16 %v186
    %v252 = vunpack.c.l.b16 %v187
    %v253 = vunpack.c.l.b16 %v188
    %v254 = vunpack.c.l.b16 %v189
    %v255 = vunpack.c.l.b16 %v190
    %v256 = vunpack.c.l.b16 %v191
    %v257 = vunpack.c.l.b16 %v192
    %v258 = vunpack.c.l.b16 %v193
    %v259 = vunpack.c.l.b16 %v194
    %v260 = vunpack.c.l.b16 %v195
    %v261 = vunpack.c.l.b16 %v196
    %v262 = vunpack.c.l.b16 %v197
    %v263 = vunpack.c.l.b16 %v198
    %v264 = vunpack.c.l.b16 %v199
    %v265 = vunpack.c.l.b16 %v200
    %v266 = vunpack.c.l.b16 %v201
    %v267 = vunpack.c.l.b16 %v202
    %v268 = vpack.c.b16 %v237, %v236
    %v269 = vpack.c.b16 %v239, %v238
    %v270 = vpack.c.b16 %v241, %v240
    %v271 = vpack.c.b16 %v243, %v242
    %v272 = vpack.c.b16 %v245, %v244
    %v273 = vpack.c.b16 %v247, %v246
    %v274 = vpack.c.b16 %v249, %v248
    %v275 = vpack.c.b16 %v251, %v250
    %v276 = vpack.c.b16 %v253, %v252
    %v277 = vpack.c.b16 %v255, %v254
    %v278 = vpack.c.b16 %v257, %v256
    %v279 = vpack.c.b16 %v259, %v258
    %v280 = vpack.c.b16 %v261, %v260
    %v281 = vpack.c.b16 %v263, %v262
    %v282 = vpack.c.b16 %v265, %v264
    %v283 = vpack.c.b16 %v267, %v266
    %300 = vmatprep.subr.bf16.mxu0 0
    %301 = vmatpush1.bf16.msra.mxu0 %v268
    %302 = vmatprep.subr.bf16.mxu0 0
    %303 = vmatpush1.bf16.msra.mxu0 %v269
    %304 = vmatprep.subr.bf16.mxu0 0
    %305 = vmatpush1.bf16.msra.mxu0 %v270
    %306 = vmatprep.subr.bf16.mxu0 0
    %307 = vmatpush1.bf16.msra.mxu0 %v271
    %308 = vmatprep.subr.bf16.mxu0 0
    %309 = vmatpush1.bf16.msra.mxu0 %v272
    %310 = vmatprep.subr.bf16.mxu0 0
    %311 = vmatpush1.bf16.msra.mxu0 %v273
    %312 = vmatprep.subr.bf16.mxu0 0
    %313 = vmatpush1.bf16.msra.mxu0 %v274
    %314 = vmatprep.subr.bf16.mxu0 0
    %315 = vmatpush1.bf16.msra.mxu0 %v275
    %316 = vmatprep.subr.bf16.mxu0 0
    %317 = vmatpush1.bf16.msra.mxu0 %v276
    %318 = vmatprep.subr.bf16.mxu0 0
    %319 = vmatpush1.bf16.msra.mxu0 %v277
    %320 = vmatprep.subr.bf16.mxu0 0
    %321 = vmatpush1.bf16.msra.mxu0 %v278
    %322 = vmatprep.subr.bf16.mxu0 0
    %323 = vmatpush1.bf16.msra.mxu0 %v279
    %324 = vmatprep.subr.bf16.mxu0 0
    %325 = vmatpush1.bf16.msra.mxu0 %v280
    %326 = vmatprep.subr.bf16.mxu0 0
    %327 = vmatpush1.bf16.msra.mxu0 %v281
    %328 = vmatprep.subr.bf16.mxu0 0
    %329 = vmatpush1.bf16.msra.mxu0 %v282
    %330 = vmatprep.subr.bf16.mxu0 0
    %331 = vmatpush1.bf16.msra.mxu0 %v283
    %332 = vmatprep.mubr.bf16.mxu0 %v170
    %333 = vmatmul.mubr.bf16.gmra.mrb[0].mxu0 %v169
    %v334 = vpop.f32.mrb[0].mxu0
    %v335 = vadd.f32 %v203, %v334
    %v336 = vpop.f32.mrb[0].mxu0
    %v337 = vpop.f32.mrb[0].mxu0
    %v338 = vpop.f32.mrb[0].mxu0
    %339 = vdwg.mxu0
    %v340 = vmax.f32 %v335, 0.0
    %v341 = vpack.c.bf16 %v340, %v340
    %v342 = vld [vmem:[%s3 + $0x80] sm:$0xf]
    %v343 = vld [vmem:[%s3 + $0x84] sm:$0xf]
    %v344 = vld [vmem:[%s3 + $0x88] sm:$0xf]
    %v345 = vld [vmem:[%s3 + $0x8c] sm:$0xf]
    %v346 = vld [vmem:[%s3 + $0x90] sm:$0xf]
    %v347 = vld [vmem:[%s3 + $0x94] sm:$0xf]
    %v348 = vld [vmem:[%s3 + $0x98] sm:$0xf]
    %v349 = vld [vmem:[%s3 + $0x9c] sm:$0xf]
    %v350 = vld [vmem:[%s5 + $0x1] ss:$0 sm:$0xff]
    %v359 = vunpack.c.l.b16 %v342
    %v360 = vunpack.c.l.b16 %v343
    %v361 = vunpack.c.l.b16 %v344
    %v362 = vunpack.c.l.b16 %v345
    %v363 = vunpack.c.l.b16 %v346
    %v364 = vunpack.c.l.b16 %v347
    %v365 = vunpack.c.l.b16 %v348
    %v366 = vunpack.c.l.b16 %v349
    %v367 = vpack.c.b16 %v360, %v359
    %v368 = vpack.c.b16 %v362, %v361
    %v369 = vpack.c.b16 %v364, %v363
    %v370 = vpack.c.b16 %v366, %v365
    %vm375 = vcmask 523264
    %v377 = vsel %vm375, %v341, 0
    %379 = vmatprep.subr.bf16.mxu0 0
    %380 = vmatpush1.bf16.msra.mxu0 %v367
    %381 = vmatprep.subr.bf16.mxu0 0
    %382 = vmatpush1.bf16.msra.mxu0 %v368
    %383 = vmatprep.subr.bf16.mxu0 0
    %384 = vmatpush1.bf16.msra.mxu0 %v369
    %385 = vmatprep.subr.bf16.mxu0 0
    %386 = vmatpush1.bf16.msra.mxu0 %v370
    %387 = vmatprep.subr.bf16.mxu0 0
    %388 = vmatpush1.bf16.msra.mxu0 0
    %389 = vmatprep.subr.bf16.mxu0 0
    %390 = vmatpush1.bf16.msra.mxu0 0
    %391 = vmatprep.subr.bf16.mxu0 0
    %392 = vmatpush1.bf16.msra.mxu0 0
    %393 = vmatprep.subr.bf16.mxu0 0
    %394 = vmatpush1.bf16.msra.mxu0 0
    %395 = vmatprep.subr.bf16.mxu0 0
    %396 = vmatpush1.bf16.msra.mxu0 0
    %397 = vmatprep.subr.bf16.mxu0 0
    %398 = vmatpush1.bf16.msra.mxu0 0
    %399 = vmatprep.subr.bf16.mxu0 0
    %400 = vmatpush1.bf16.msra.mxu0 0
    %401 = vmatprep.subr.bf16.mxu0 0
    %402 = vmatpush1.bf16.msra.mxu0 0
    %403 = vmatprep.subr.bf16.mxu0 0
    %404 = vmatpush1.bf16.msra.mxu0 0
    %405 = vmatprep.subr.bf16.mxu0 0
    %406 = vmatpush1.bf16.msra.mxu0 0
    %407 = vmatprep.subr.bf16.mxu0 0
    %408 = vmatpush1.bf16.msra.mxu0 0
    %409 = vmatprep.subr.bf16.mxu0 0
    %410 = vmatpush1.bf16.msra.mxu0 0
    %411 = vmatprep.mubr.bf16.mxu0 0
    %412 = vmatmul.mubr.bf16.gmra.mrb[0].mxu0 %v377
    %v413 = vpop.f32.mrb[0].mxu0
    %v414 = vadd.f32 %v350, %v413
    %v415 = vpop.f32.mrb[0].mxu0
    %v416 = vpop.f32.mrb[0].mxu0
    %v417 = vpop.f32.mrb[0].mxu0
    %418 = vdwg.mxu0
    %v419 = vmax.f32 %v414, 0.0
    %v420 = vld [vmem:[#allocation2] sm:$0xff]
    %v421 = vld [vmem:[#allocation2 + $0x8] sm:$0xff]
    %v422 = vld [vmem:[#allocation2 + $0x10] sm:$0xff]
    %v423 = vld [vmem:[#allocation2 + $0x18] sm:$0xff]
    %v424 = vld [vmem:[#allocation2 + $0x20] sm:$0xff]
    %v425 = vld [vmem:[#allocation2 + $0x28] sm:$0xff]
    %v426 = vld [vmem:[#allocation2 + $0x30] sm:$0xff]
    %v427 = vld [vmem:[#allocation2 + $0x38] sm:$0xff]
    %v428 = vld [vmem:[#allocation2 + $0x40] sm:$0xff]
    %v429 = vld [vmem:[#allocation2 + $0x48] sm:$0xff]
    %v430 = vld [vmem:[#allocation2 + $0x50] sm:$0xff]
    %v431 = vld [vmem:[#allocation2 + $0x58] sm:$0xff]
    %v432 = vld [vmem:[#allocation2 + $0x60] sm:$0xff]
    %v433 = vld [vmem:[#allocation2 + $0x68] sm:$0xff]
    %v434 = vld [vmem:[#allocation2 + $0x70] sm:$0xff]
    %v435 = vld [vmem:[#allocation2 + $0x78] sm:$0xff]
    %v436 = vld [vmem:[#allocation2 + $0x80] sm:$0xff]
    %v437 = vld [vmem:[#allocation2 + $0x88] sm:$0xff]
    %v438 = vld [vmem:[#allocation2 + $0x90] sm:$0xff]
    %v439 = vld [vmem:[#allocation2 + $0x98] sm:$0xff]
    %v440 = vld [vmem:[#allocation2 + $0xa0] sm:$0xff]
    %v441 = vld [vmem:[#allocation2 + $0xa8] sm:$0xff]
    %v442 = vld [vmem:[#allocation2 + $0xb0] sm:$0xff]
    %v443 = vld [vmem:[#allocation2 + $0xb8] sm:$0xff]
    %v444 = vld [vmem:[#allocation2 + $0xc0] sm:$0xff]
    %v445 = vld [vmem:[#allocation2 + $0xc8] sm:$0xff]
    %v446 = vld [vmem:[#allocation2 + $0xd0] sm:$0xff]
    %v447 = vld [vmem:[#allocation2 + $0xd8] sm:$0xff]
    %v448 = vld [vmem:[#allocation2 + $0xe0] sm:$0xff]
    %v449 = vld [vmem:[#allocation2 + $0xe8] sm:$0xff]
    %v450 = vld [vmem:[#allocation2 + $0xf0] sm:$0xff]
    %v451 = vld [vmem:[#allocation2 + $0xf8] sm:$0xff]
    %s452 = scalar_lea.vmem %s5, 2
    %v453 = vld [vmem:[%s452] ss:$8 sm:$0x3]
    %v455 = vlaneseq
    %v456 = vshrl.u32 %v455, 7
    %v457 = vsub.s32 0, %v456
    %v458 = vrot.slane %v453, %v457
    %v459 = vlaneseq
    %v460 = vshrl.u32 %v459, 7
    %v461 = vsub.s32 1, %v460
    %v462 = vrot.slane %v453, %v461
    %v497 = vunpack.c.l.b16 %v420
    %v498 = vunpack.c.h.b16 %v420
    %v499 = vunpack.c.l.b16 %v421
    %v500 = vunpack.c.h.b16 %v421
    %v501 = vunpack.c.l.b16 %v422
    %v502 = vunpack.c.h.b16 %v422
    %v503 = vunpack.c.l.b16 %v423
    %v504 = vunpack.c.h.b16 %v423
    %v505 = vunpack.c.l.b16 %v424
    %v506 = vunpack.c.h.b16 %v424
    %v507 = vunpack.c.l.b16 %v425
    %v508 = vunpack.c.h.b16 %v425
    %v509 = vunpack.c.l.b16 %v426
    %v510 = vunpack.c.h.b16 %v426
    %v511 = vunpack.c.l.b16 %v427
    %v512 = vunpack.c.h.b16 %v427
    %v513 = vunpack.c.l.b16 %v428
    %v514 = vunpack.c.h.b16 %v428
    %v515 = vunpack.c.l.b16 %v429
    %v516 = vunpack.c.h.b16 %v429
    %v517 = vunpack.c.l.b16 %v430
    %v518 = vunpack.c.h.b16 %v430
    %v519 = vunpack.c.l.b16 %v431
    %v520 = vunpack.c.h.b16 %v431
    %v521 = vunpack.c.l.b16 %v432
    %v522 = vunpack.c.h.b16 %v432
    %v523 = vunpack.c.l.b16 %v433
    %v524 = vunpack.c.h.b16 %v433
    %v525 = vunpack.c.l.b16 %v434
    %v526 = vunpack.c.h.b16 %v434
    %v527 = vunpack.c.l.b16 %v435
    %v528 = vunpack.c.h.b16 %v435
    %v529 = vunpack.c.l.b16 %v436
    %v530 = vunpack.c.h.b16 %v436
    %v531 = vunpack.c.l.b16 %v437
    %v532 = vunpack.c.h.b16 %v437
    %v533 = vunpack.c.l.b16 %v438
    %v534 = vunpack.c.h.b16 %v438
    %v535 = vunpack.c.l.b16 %v439
    %v536 = vunpack.c.h.b16 %v439
    %v537 = vunpack.c.l.b16 %v440
    %v538 = vunpack.c.h.b16 %v440
    %v539 = vunpack.c.l.b16 %v441
    %v540 = vunpack.c.h.b16 %v441
    %v541 = vunpack.c.l.b16 %v442
    %v542 = vunpack.c.h.b16 %v442
    %v543 = vunpack.c.l.b16 %v443
    %v544 = vunpack.c.h.b16 %v443
    %v545 = vunpack.c.l.b16 %v444
    %v546 = vunpack.c.h.b16 %v444
    %v547 = vunpack.c.l.b16 %v445
    %v548 = vunpack.c.h.b16 %v445
    %v549 = vunpack.c.l.b16 %v446
    %v550 = vunpack.c.h.b16 %v446
    %v551 = vunpack.c.l.b16 %v447
    %v552 = vunpack.c.h.b16 %v447
    %v553 = vunpack.c.l.b16 %v448
    %v554 = vunpack.c.h.b16 %v448
    %v555 = vunpack.c.l.b16 %v449
    %v556 = vunpack.c.h.b16 %v449
    %v557 = vunpack.c.l.b16 %v450
    %v558 = vunpack.c.h.b16 %v450
    %v559 = vunpack.c.l.b16 %v451
    %v560 = vunpack.c.h.b16 %v451
    %v561 = vpack.c.b16 %v499, %v497
    %v562 = vpack.c.b16 %v500, %v498
    %v563 = vpack.c.b16 %v503, %v501
    %v564 = vpack.c.b16 %v504, %v502
    %v565 = vpack.c.b16 %v507, %v505
    %v566 = vpack.c.b16 %v508, %v506
    %v567 = vpack.c.b16 %v511, %v509
    %v568 = vpack.c.b16 %v512, %v510
    %v569 = vpack.c.b16 %v515, %v513
    %v570 = vpack.c.b16 %v516, %v514
    %v571 = vpack.c.b16 %v519, %v517
    %v572 = vpack.c.b16 %v520, %v518
    %v573 = vpack.c.b16 %v523, %v521
    %v574 = vpack.c.b16 %v524, %v522
    %v575 = vpack.c.b16 %v527, %v525
    %v576 = vpack.c.b16 %v528, %v526
    %v577 = vpack.c.b16 %v531, %v529
    %v578 = vpack.c.b16 %v532, %v530
    %v579 = vpack.c.b16 %v535, %v533
    %v580 = vpack.c.b16 %v536, %v534
    %v581 = vpack.c.b16 %v539, %v537
    %v582 = vpack.c.b16 %v540, %v538
    %v583 = vpack.c.b16 %v543, %v541
    %v584 = vpack.c.b16 %v544, %v542
    %v585 = vpack.c.b16 %v547, %v545
    %v586 = vpack.c.b16 %v548, %v546
    %v587 = vpack.c.b16 %v551, %v549
    %v588 = vpack.c.b16 %v552, %v550
    %v589 = vpack.c.b16 %v555, %v553
    %v590 = vpack.c.b16 %v556, %v554
    %v591 = vpack.c.b16 %v559, %v557
    %v592 = vpack.c.b16 %v560, %v558
    %625 = vmatprep.subr.bf16.mxu0 %v562
    %626 = vmatpush1.bf16.msra.mxu0 %v561
    %627 = vmatprep.subr.bf16.mxu0 %v564
    %628 = vmatpush1.bf16.msra.mxu0 %v563
    %629 = vmatprep.subr.bf16.mxu0 %v566
    %630 = vmatpush1.bf16.msra.mxu0 %v565
    %631 = vmatprep.subr.bf16.mxu0 %v568
    %632 = vmatpush1.bf16.msra.mxu0 %v567
    %633 = vmatprep.subr.bf16.mxu0 %v570
    %634 = vmatpush1.bf16.msra.mxu0 %v569
    %635 = vmatprep.subr.bf16.mxu0 %v572
    %636 = vmatpush1.bf16.msra.mxu0 %v571
    %637 = vmatprep.subr.bf16.mxu0 %v574
    %638 = vmatpush1.bf16.msra.mxu0 %v573
    %639 = vmatprep.subr.bf16.mxu0 %v576
    %640 = vmatpush1.bf16.msra.mxu0 %v575
    %641 = vmatprep.subr.bf16.mxu0 %v578
    %642 = vmatpush1.bf16.msra.mxu0 %v577
    %643 = vmatprep.subr.bf16.mxu0 %v580
    %644 = vmatpush1.bf16.msra.mxu0 %v579
    %645 = vmatprep.subr.bf16.mxu0 %v582
    %646 = vmatpush1.bf16.msra.mxu0 %v581
    %647 = vmatprep.subr.bf16.mxu0 %v584
    %648 = vmatpush1.bf16.msra.mxu0 %v583
    %649 = vmatprep.subr.bf16.mxu0 %v586
    %650 = vmatpush1.bf16.msra.mxu0 %v585
    %651 = vmatprep.subr.bf16.mxu0 %v588
    %652 = vmatpush1.bf16.msra.mxu0 %v587
    %653 = vmatprep.subr.bf16.mxu0 %v590
    %654 = vmatpush1.bf16.msra.mxu0 %v589
    %655 = vmatprep.subr.bf16.mxu0 %v592
    %656 = vmatpush1.bf16.msra.mxu0 %v591
    %657 = vmatprep.mubr.bf16.mxu0 %v170
    %658 = vmatmul.mubr.bf16.gmra.mrb[0].mxu0 %v169
    %v659 = vpop.f32.mrb[0].mxu0
    %v660 = vadd.f32 %v458, %v659
    %v661 = vpop.f32.mrb[0].mxu0
    %v662 = vadd.f32 %v462, %v661
    %v663 = vpop.f32.mrb[0].mxu0
    %v664 = vpop.f32.mrb[0].mxu0
    %665 = vdwg.mxu0
    %v666 = vmul.f32 %v165, %v660
    %v667 = vmul.f32 %v167, %v662
    %v668 = vadd.f32 %v165, %v666
    %v669 = vadd.f32 %v167, %v667
    %v670 = vpack.c.bf16 %v668, %v668
    %v671 = vpack.c.bf16 %v669, %v669
    %v672 = vld [vmem:[#allocation2 + $0x100] sm:$0xff]
    %v673 = vld [vmem:[#allocation2 + $0x108] sm:$0xff]
    %v674 = vld [vmem:[#allocation2 + $0x110] sm:$0xff]
    %v675 = vld [vmem:[#allocation2 + $0x118] sm:$0xff]
    %v676 = vld [vmem:[#allocation2 + $0x120] sm:$0xff]
    %v677 = vld [vmem:[#allocation2 + $0x128] sm:$0xff]
    %v678 = vld [vmem:[#allocation2 + $0x130] sm:$0xff]
    %v679 = vld [vmem:[#allocation2 + $0x138] sm:$0xff]
    %v680 = vld [vmem:[#allocation2 + $0x140] sm:$0xff]
    %v681 = vld [vmem:[#allocation2 + $0x148] sm:$0xff]
    %v682 = vld [vmem:[#allocation2 + $0x150] sm:$0xff]
    %v683 = vld [vmem:[#allocation2 + $0x158] sm:$0xff]
    %v684 = vld [vmem:[#allocation2 + $0x160] sm:$0xff]
    %v685 = vld [vmem:[#allocation2 + $0x168] sm:$0xff]
    %v686 = vld [vmem:[#allocation2 + $0x170] sm:$0xff]
    %v687 = vld [vmem:[#allocation2 + $0x178] sm:$0xff]
    %v688 = vld [vmem:[#allocation2 + $0x180] sm:$0xff]
    %v689 = vld [vmem:[#allocation2 + $0x188] sm:$0xff]
    %v690 = vld [vmem:[#allocation2 + $0x190] sm:$0xff]
    %v691 = vld [vmem:[#allocation2 + $0x198] sm:$0xff]
    %v692 = vld [vmem:[#allocation2 + $0x1a0] sm:$0xff]
    %v693 = vld [vmem:[#allocation2 + $0x1a8] sm:$0xff]
    %v694 = vld [vmem:[#allocation2 + $0x1b0] sm:$0xff]
    %v695 = vld [vmem:[#allocation2 + $0x1b8] sm:$0xff]
    %v696 = vld [vmem:[#allocation2 + $0x1c0] sm:$0xff]
    %v697 = vld [vmem:[#allocation2 + $0x1c8] sm:$0xff]
    %v698 = vld [vmem:[#allocation2 + $0x1d0] sm:$0xff]
    %v699 = vld [vmem:[#allocation2 + $0x1d8] sm:$0xff]
    %v700 = vld [vmem:[#allocation2 + $0x1e0] sm:$0xff]
    %v701 = vld [vmem:[#allocation2 + $0x1e8] sm:$0xff]
    %v702 = vld [vmem:[#allocation2 + $0x1f0] sm:$0xff]
    %v703 = vld [vmem:[#allocation2 + $0x1f8] sm:$0xff]
    %s704 = scalar_lea.vmem %s5, 3
    %v705 = vld [vmem:[%s704] ss:$8 sm:$0x3]
    %v707 = vlaneseq
    %v708 = vshrl.u32 %v707, 7
    %v709 = vsub.s32 0, %v708
    %v710 = vrot.slane %v705, %v709
    %v711 = vlaneseq
    %v712 = vshrl.u32 %v711, 7
    %v713 = vsub.s32 1, %v712
    %v714 = vrot.slane %v705, %v713
    %v749 = vunpack.c.l.b16 %v672
    %v750 = vunpack.c.h.b16 %v672
    %v751 = vunpack.c.l.b16 %v673
    %v752 = vunpack.c.h.b16 %v673
    %v753 = vunpack.c.l.b16 %v674
    %v754 = vunpack.c.h.b16 %v674
    %v755 = vunpack.c.l.b16 %v675
    %v756 = vunpack.c.h.b16 %v675
    %v757 = vunpack.c.l.b16 %v676
    %v758 = vunpack.c.h.b16 %v676
    %v759 = vunpack.c.l.b16 %v677
    %v760 = vunpack.c.h.b16 %v677
    %v761 = vunpack.c.l.b16 %v678
    %v762 = vunpack.c.h.b16 %v678
    %v763 = vunpack.c.l.b16 %v679
    %v764 = vunpack.c.h.b16 %v679
    %v765 = vunpack.c.l.b16 %v680
    %v766 = vunpack.c.h.b16 %v680
    %v767 = vunpack.c.l.b16 %v681
    %v768 = vunpack.c.h.b16 %v681
    %v769 = vunpack.c.l.b16 %v682
    %v770 = vunpack.c.h.b16 %v682
    %v771 = vunpack.c.l.b16 %v683
    %v772 = vunpack.c.h.b16 %v683
    %v773 = vunpack.c.l.b16 %v684
    %v774 = vunpack.c.h.b16 %v684
    %v775 = vunpack.c.l.b16 %v685
    %v776 = vunpack.c.h.b16 %v685
    %v777 = vunpack.c.l.b16 %v686
    %v778 = vunpack.c.h.b16 %v686
    %v779 = vunpack.c.l.b16 %v687
    %v780 = vunpack.c.h.b16 %v687
    %v781 = vunpack.c.l.b16 %v688
    %v782 = vunpack.c.h.b16 %v688
    %v783 = vunpack.c.l.b16 %v689
    %v784 = vunpack.c.h.b16 %v689
    %v785 = vunpack.c.l.b16 %v690
    %v786 = vunpack.c.h.b16 %v690
    %v787 = vunpack.c.l.b16 %v691
    %v788 = vunpack.c.h.b16 %v691
    %v789 = vunpack.c.l.b16 %v692
    %v790 = vunpack.c.h.b16 %v692
    %v791 = vunpack.c.l.b16 %v693
    %v792 = vunpack.c.h.b16 %v693
    %v793 = vunpack.c.l.b16 %v694
    %v794 = vunpack.c.h.b16 %v694
    %v795 = vunpack.c.l.b16 %v695
    %v796 = vunpack.c.h.b16 %v695
    %v797 = vunpack.c.l.b16 %v696
    %v798 = vunpack.c.h.b16 %v696
    %v799 = vunpack.c.l.b16 %v697
    %v800 = vunpack.c.h.b16 %v697
    %v801 = vunpack.c.l.b16 %v698
    %v802 = vunpack.c.h.b16 %v698
    %v803 = vunpack.c.l.b16 %v699
    %v804 = vunpack.c.h.b16 %v699
    %v805 = vunpack.c.l.b16 %v700
    %v806 = vunpack.c.h.b16 %v700
    %v807 = vunpack.c.l.b16 %v701
    %v808 = vunpack.c.h.b16 %v701
    %v809 = vunpack.c.l.b16 %v702
    %v810 = vunpack.c.h.b16 %v702
    %v811 = vunpack.c.l.b16 %v703
    %v812 = vunpack.c.h.b16 %v703
    %v813 = vpack.c.b16 %v751, %v749
    %v814 = vpack.c.b16 %v752, %v750
    %v815 = vpack.c.b16 %v755, %v753
    %v816 = vpack.c.b16 %v756, %v754
    %v817 = vpack.c.b16 %v759, %v757
    %v818 = vpack.c.b16 %v760, %v758
    %v819 = vpack.c.b16 %v763, %v761
    %v820 = vpack.c.b16 %v764, %v762
    %v821 = vpack.c.b16 %v767, %v765
    %v822 = vpack.c.b16 %v768, %v766
    %v823 = vpack.c.b16 %v771, %v769
    %v824 = vpack.c.b16 %v772, %v770
    %v825 = vpack.c.b16 %v775, %v773
    %v826 = vpack.c.b16 %v776, %v774
    %v827 = vpack.c.b16 %v779, %v777
    %v828 = vpack.c.b16 %v780, %v778
    %v829 = vpack.c.b16 %v783, %v781
    %v830 = vpack.c.b16 %v784, %v782
    %v831 = vpack.c.b16 %v787, %v785
    %v832 = vpack.c.b16 %v788, %v786
    %v833 = vpack.c.b16 %v791, %v789
    %v834 = vpack.c.b16 %v792, %v790
    %v835 = vpack.c.b16 %v795, %v793
    %v836 = vpack.c.b16 %v796, %v794
    %v837 = vpack.c.b16 %v799, %v797
    %v838 = vpack.c.b16 %v800, %v798
    %v839 = vpack.c.b16 %v803, %v801
    %v840 = vpack.c.b16 %v804, %v802
    %v841 = vpack.c.b16 %v807, %v805
    %v842 = vpack.c.b16 %v808, %v806
    %v843 = vpack.c.b16 %v811, %v809
    %v844 = vpack.c.b16 %v812, %v810
    %877 = vmatprep.subr.bf16.mxu0 %v814
    %878 = vmatpush1.bf16.msra.mxu0 %v813
    %879 = vmatprep.subr.bf16.mxu0 %v816
    %880 = vmatpush1.bf16.msra.mxu0 %v815
    %881 = vmatprep.subr.bf16.mxu0 %v818
    %882 = vmatpush1.bf16.msra.mxu0 %v817
    %883 = vmatprep.subr.bf16.mxu0 %v820
    %884 = vmatpush1.bf16.msra.mxu0 %v819
    %885 = vmatprep.subr.bf16.mxu0 %v822
    %886 = vmatpush1.bf16.msra.mxu0 %v821
    %887 = vmatprep.subr.bf16.mxu0 %v824
    %888 = vmatpush1.bf16.msra.mxu0 %v823
    %889 = vmatprep.subr.bf16.mxu0 %v826
    %890 = vmatpush1.bf16.msra.mxu0 %v825
    %891 = vmatprep.subr.bf16.mxu0 %v828
    %892 = vmatpush1.bf16.msra.mxu0 %v827
    %893 = vmatprep.subr.bf16.mxu0 %v830
    %894 = vmatpush1.bf16.msra.mxu0 %v829
    %895 = vmatprep.subr.bf16.mxu0 %v832
    %896 = vmatpush1.bf16.msra.mxu0 %v831
    %897 = vmatprep.subr.bf16.mxu0 %v834
    %898 = vmatpush1.bf16.msra.mxu0 %v833
    %899 = vmatprep.subr.bf16.mxu0 %v836
    %900 = vmatpush1.bf16.msra.mxu0 %v835
    %901 = vmatprep.subr.bf16.mxu0 %v838
    %902 = vmatpush1.bf16.msra.mxu0 %v837
    %903 = vmatprep.subr.bf16.mxu0 %v840
    %904 = vmatpush1.bf16.msra.mxu0 %v839
    %905 = vmatprep.subr.bf16.mxu0 %v842
    %906 = vmatpush1.bf16.msra.mxu0 %v841
    %907 = vmatprep.subr.bf16.mxu0 %v844
    %908 = vmatpush1.bf16.msra.mxu0 %v843
    %909 = vmatprep.mubr.bf16.mxu0 %v671
    %910 = vmatmul.mubr.bf16.gmra.mrb[0].mxu0 %v670
    %v911 = vpop.f32.mrb[0].mxu0
    %v912 = vadd.f32 %v710, %v911
    %v913 = vpop.f32.mrb[0].mxu0
    %v914 = vadd.f32 %v714, %v913
    %v915 = vpop.f32.mrb[0].mxu0
    %v916 = vpop.f32.mrb[0].mxu0
    %917 = vdwg.mxu0
    %v918 = vmul.f32 %v165, %v912
    %v919 = vmul.f32 %v167, %v914
    %v920 = vadd.f32 %v668, %v918
    %v921 = vadd.f32 %v669, %v919
    %v922 = vld [vmem:[%s5 + $0x4] ss:$0 sm:$0xff]
    %v923 = vmul.f32 %v419, %v922
    %v924 = vsel %vm375, %v923, 0.0
    %925 = vadd.xlane.f32.xlu0 %v924
    %v926 = vpop.xlane.xlu0 %925
    %s927 = scalar_lea.vmem %s5, 5
    %v928 = vld [vmem:[%s927] ss:$8 sm:$0x3]
    %v930 = vlaneseq
    %v931 = vshrl.u32 %v930, 7
    %v932 = vsub.s32 0, %v931
    %v933 = vrot.slane %v928, %v932
    %v934 = vlaneseq
    %v935 = vshrl.u32 %v934, 7
    %v936 = vsub.s32 1, %v935
    %v937 = vrot.slane %v928, %v936
    %v940 = vmul.f32 %v920, %v933
    %v941 = vmul.f32 %v921, %v937
    %v942 = vadd.f32 %v940, %v941
    %943 = vadd.xlane.f32.xlu0 %v942
    %v944 = vpop.xlane.xlu0 %943
    %v945 = vadd.f32 %v926, %v944
    %v946 = vld [vmem:[%s5 + $0x6] ss:$0 sm:$0xff]
    %v947 = vadd.f32 %v945, %v946
    %vm948 = vcmask 7168
    %949 = vst.msk [vmem:[%s6] sm:$0xff] %vm948, %v947
    // Predicated region
    $region30: #{_forward.1} parent=1 // pred_check
      _
    $region31: #{_forward.1} parent=1 // pred_check_branch
      %951 = sbr.rel (0) target = $region33
    $region32: #{_forward.1} parent=1 // pred_region
      _
    $region33: #{_forward.1} parent=1 // pred_fallthru
      _
    // Predicated region
    $region34: #{_forward.1} parent=1 // pred_check
      _
    $region35: #{_forward.1} parent=1 // pred_check_branch
      %953 = sbr.rel (0) target = $region37
    $region36: #{_forward.1} parent=1 // pred_region
      _
    $region37: #{_forward.1} parent=1 // pred_fallthru
      _
    %954 = vsyncpa [#allocation3], 1

</llo_original>
